<compile_context>
chip_gen: v6e
topology: v6e:2x2x1
jax: 0.10.0
libtpu: 0.0.40
codegen_flags: <defaults>
</compile_context>

<pallas_src>
import jax
import jax.numpy as jnp
from jax import lax
from jax.experimental import pallas as pl
from jax.experimental.pallas import tpu as pltpu


def _round_up(v, m):
    return ((v + m - 1) // m) * m


def _gcn_pe_kernel_ax_first(a_ref, x_ref, w_ref, o_ref):
    """(A_tile @ x_b) @ W^T  — used when F_out_padded >= F_in."""
    # a_ref: (TN, N_pad)  x_ref: (1, N_pad, F_in)
    # w_ref: (F_out_p, F_in)  o_ref: (1, TN, F_out_p)
    ax = jnp.dot(a_ref[...], x_ref[0],
                 preferred_element_type=jnp.float32)                # (TN, F_in)
    y = lax.dot_general(ax.astype(w_ref.dtype), w_ref[...],
                        dimension_numbers=(((1,), (1,)), ((), ())),
                        preferred_element_type=jnp.float32)         # (TN, F_out_p)
    o_ref[0] = jnp.maximum(y, 0.0).astype(o_ref.dtype)


def _gcn_pe_kernel_w_first(a_ref, x_ref, w_ref, o_ref, xw_ref):
    """A_tile @ (x_b @ W^T)  — used when F_out_padded < F_in (fewer FLOPs).

    The per-batch projection x_b @ W^T is computed once at row-tile 0 and
    cached in VMEM scratch; the row-tile grid axis is therefore 'arbitrary'.
    """
    @pl.when(pl.program_id(1) == 0)
    def _():
        xw = lax.dot_general(x_ref[0], w_ref[...],
                             dimension_numbers=(((1,), (1,)), ((), ())),
                             preferred_element_type=jnp.float32)    # (N_pad, F_out_p)
        xw_ref[...] = xw.astype(xw_ref.dtype)

    y = jnp.dot(a_ref[...], xw_ref[...],
                preferred_element_type=jnp.float32)                 # (TN, F_out_p)
    o_ref[0] = jnp.maximum(y, 0.0).astype(o_ref.dtype)


def gcn_pe(adj, x, weight, *, compute_dtype=None, row_tile=256):
    """Pallas GCN_PE forward.

    adj    : (N, N)          sym-normalized adjacency
    x      : (B, N, F_in)
    weight : (F_out, F_in)   nn.Linear weight (bias-free)
    returns: (B, N, F_out)
    """
    B, N, F_in = x.shape
    F_out, F_in_w = weight.shape
    assert F_in_w == F_in, "weight must be (F_out, F_in)"

    out_dtype = x.dtype
    if compute_dtype is None:
        compute_dtype = x.dtype
    compute_dtype = jnp.dtype(compute_dtype)

    # Lane-dense output: pad F_out up to a multiple of 128 (dense vst stores).
    F_out_p = _round_up(F_out, 128)

    # Row tile of A (and of the output rows). If N is small, take it whole
    # (block dims equal to the full array dims are always legal).
    if N <= row_tile:
        TN, N_pad = N, N
    else:
        TN = row_tile
        N_pad = _round_up(N, TN)
    n_tiles = N_pad // TN

    adj_p = adj if N_pad == N else jnp.pad(adj, ((0, N_pad - N), (0, N_pad - N)))
    x_p = x if N_pad == N else jnp.pad(x, ((0, 0), (0, N_pad - N), (0, 0)))
    w_p = weight if F_out_p == F_out else jnp.pad(weight, ((0, F_out_p - F_out), (0, 0)))

    adj_p = adj_p.astype(compute_dtype)
    x_p = x_p.astype(compute_dtype)
    w_p = w_p.astype(compute_dtype)

    # Association choice (per batch):
    #   (A@x)@W^T : 2*N_pad^2*F_in        + 2*N_pad*F_in*F_out_p
    #   A@(x@W^T) : 2*N_pad*F_in*F_out_p  + 2*N_pad^2*F_out_p
    w_first = F_out_p < F_in

    cdt = compute_dtype.itemsize
    odt = jnp.dtype(out_dtype).itemsize
    if w_first:
        flops = 2 * B * (N_pad * F_in * F_out_p + N_pad * N_pad * F_out_p)
    else:
        flops = 2 * B * (N_pad * N_pad * F_in + N_pad * F_in * F_out_p)
    bytes_accessed = ((adj_p.size + x_p.size + w_p.size) * cdt
                      + B * N_pad * F_out_p * odt)
    cost = pl.CostEstimate(flops=flops, transcendentals=0,
                           bytes_accessed=bytes_accessed)

    # Rough per-step VMEM footprint (double-buffered operands + output tile),
    # plus the per-batch projection scratch on the w-first path.
    vmem_needed = 2 * (TN * N_pad * cdt + N_pad * F_in * cdt
                       + F_out_p * F_in * cdt + TN * F_out_p * odt)
    if w_first:
        vmem_needed += N_pad * F_out_p * cdt
    vmem_limit = int(min(max(2 * vmem_needed, 32 * 2 ** 20), 64 * 2 ** 20))

    in_specs = [
        pl.BlockSpec((TN, N_pad), lambda b, i: (i, 0)),           # A row tile
        pl.BlockSpec((1, N_pad, F_in), lambda b, i: (b, 0, 0)),   # x batch slice
        pl.BlockSpec((F_out_p, F_in), lambda b, i: (0, 0)),       # W (replicated, untransposed)
    ]
    out_specs = pl.BlockSpec((1, TN, F_out_p), lambda b, i: (b, i, 0))

    if w_first:
        kernel = _gcn_pe_kernel_w_first
        scratch_shapes = [pltpu.VMEM((N_pad, F_out_p), compute_dtype)]
        dim_sem = ("parallel", "arbitrary")   # row-tile axis carries the cached projection
    else:
        kernel = _gcn_pe_kernel_ax_first
        scratch_shapes = []
        dim_sem = ("parallel", "parallel")

    out_p = pl.pallas_call(
        kernel,
        out_shape=jax.ShapeDtypeStruct((B, N_pad, F_out_p), out_dtype),
        grid_spec=pltpu.PrefetchScalarGridSpec(
            num_scalar_prefetch=0,
            grid=(B, n_tiles),
            in_specs=in_specs,
            out_specs=out_specs,
            scratch_shapes=scratch_shapes,
        ),
        compiler_params=pltpu.CompilerParams(
            dimension_semantics=dim_sem,
            vmem_limit_bytes=vmem_limit,
        ),
        cost_estimate=cost,
    )(adj_p, x_p, w_p)

    # TODO(synk): for tiny B*N, fold the batch into the lane axis (A @ x_flat)
    # to better fill the 256-wide MXU; skipped to keep layouts simple.
    return out_p[:, :N, :F_out]


def gcn_pe_reference(adj, x, weight):
    ax = jnp.einsum("nm,bmf->bnf", adj, x)
    y = jnp.einsum("bnf,of->bno", ax, weight)
    return jnp.maximum(y, 0.0)


if __name__ == "__main__":
    root = jax.random.PRNGKey(0)
    key1, key2 = jax.random.split(root, 2)

    def make_inputs(key, B, N, F_in, F_out):
        k_adj, k_x, k_w = jax.random.split(key, 3)
        # Deterministic symmetric-normalized adjacency: D^-1/2 (A + I) D^-1/2
        raw = (jax.random.uniform(k_adj, (N, N)) > 0.5).astype(jnp.float32)
        raw = jnp.maximum(raw, raw.T) + jnp.eye(N, dtype=jnp.float32)
        deg = jnp.sum(raw, axis=-1)
        d_inv_sqrt = 1.0 / jnp.sqrt(deg)
        adj = raw * d_inv_sqrt[:, None] * d_inv_sqrt[None, :]
        x = jax.random.normal(k_x, (B, N, F_in), dtype=jnp.float32)
        w = jax.random.normal(k_w, (F_out, F_in), dtype=jnp.float32) * 0.1
        return adj, x, w

    # 1) Baseline module shapes (single row tile, (A@x)@W^T path), f32.
    adj, x, w = make_inputs(key1, B=2, N=16, F_in=32, F_out=32)
    out = jax.block_until_ready(gcn_pe(adj, x, w))
    ref = gcn_pe_reference(adj, x, w)
    assert out.shape == ref.shape
    assert jnp.allclose(out, ref, atol=1e-5, rtol=1e-5), "f32 ax-first mismatch"

    # 2) Row-tiled A + W-first association (F_out < F_in) + padded lane dim, f32.
    adj2, x2, w2 = make_inputs(key2, B=2, N=48, F_in=160, F_out=32)
    out2 = jax.block_until_ready(gcn_pe(adj2, x2, w2, row_tile=16))
    ref2 = gcn_pe_reference(adj2, x2, w2)
    assert out2.shape == ref2.shape
    assert jnp.allclose(out2, ref2, atol=1e-4, rtol=1e-4), "f32 w-first mismatch"

    # 3) bf16 compute with f32 MXU accumulation — looser tolerance.
    out3 = jax.block_until_ready(gcn_pe(adj, x, w, compute_dtype=jnp.bfloat16))
    assert out3.shape == ref.shape
    assert jnp.allclose(out3, ref, atol=1e-1, rtol=1e-1), "bf16 mismatch"

    print("KERNEL_OK")
</pallas_src>

<mosaic_0001>
module attributes {stable_mosaic.version = 11 : i64} {
  func.func @_gcn_pe_kernel_ax_first(%arg0: i32, %arg1: i32, %arg2: memref<16x16xf32, #tpu.memory_space<vmem>>, %arg3: memref<1x16x32xf32, #tpu.memory_space<vmem>>, %arg4: memref<128x32xf32, #tpu.memory_space<vmem>>, %arg5: memref<1x16x128xf32, #tpu.memory_space<vmem>>) attributes {dimension_semantics = [#tpu.dimension_semantics<parallel>, #tpu.dimension_semantics<parallel>], iteration_bounds = array<i64: 2, 1>, scalar_prefetch = 0 : i64, scratch_operands = 0 : i64, tpu.core_type = #tpu.core_type<tc>, window_params = [{transform_indices = @transform_0, window_bounds = array<i64: 16, 16>}, {transform_indices = @transform_1, window_bounds = array<i64: 1, 16, 32>}, {pipeline_mode = #tpu.pipeline_mode<synchronous>, transform_indices = @transform_2, window_bounds = array<i64: 128, 32>}, {transform_indices = @transform_3, window_bounds = array<i64: 1, 16, 128>}]} {
    %c0 = arith.constant 0 : index
    %c0_0 = arith.constant 0 : index
    %0 = vector.load %arg2[%c0, %c0_0] : memref<16x16xf32, #tpu.memory_space<vmem>>, vector<16x16xf32>
    %c0_1 = arith.constant 0 : index
    %c0_2 = arith.constant 0 : index
    %c0_3 = arith.constant 0 : index
    %1 = vector.load %arg3[%c0_1, %c0_2, %c0_3] : memref<1x16x32xf32, #tpu.memory_space<vmem>>, vector<1x16x32xf32>
    %2 = vector.shape_cast %1 : vector<1x16x32xf32> to vector<16x32xf32>
    %cst = arith.constant dense<0.000000e+00> : vector<16x32xf32>
    %3 = tpu.matmul %0, %2, %cst {dimension_numbers = #tpu.dot_dimension_numbers<[1], [0], [0], [1], [0, 0, 1, 1], [], []>} : vector<16x16xf32>, vector<16x32xf32>, vector<16x32xf32> -> vector<16x32xf32>
    %c0_4 = arith.constant 0 : index
    %c0_5 = arith.constant 0 : index
    %4 = vector.load %arg4[%c0_4, %c0_5] : memref<128x32xf32, #tpu.memory_space<vmem>>, vector<128x32xf32>
    %cst_6 = arith.constant dense<0.000000e+00> : vector<16x128xf32>
    %5 = tpu.matmul %3, %4, %cst_6 {dimension_numbers = #tpu.dot_dimension_numbers<[1], [1], [0], [0], [0, 0, 1, 0], [], []>} : vector<16x32xf32>, vector<128x32xf32>, vector<16x128xf32> -> vector<16x128xf32>
    %cst_7 = arith.constant 0.000000e+00 : f32
    %6 = vector.broadcast %cst_7 : f32 to vector<16x128xf32>
    %7 = arith.maximumf %5, %6 : vector<16x128xf32>
    %c0_8 = arith.constant 0 : index
    %c0_9 = arith.constant 0 : index
    %c0_10 = arith.constant 0 : index
    %8 = vector.load %arg5[%c0_8, %c0_9, %c0_10] : memref<1x16x128xf32, #tpu.memory_space<vmem>>, vector<1x16x128xf32>
    %9 = vector.shape_cast %8 : vector<1x16x128xf32> to vector<16x128xf32>
    %10 = vector.shape_cast %7 : vector<16x128xf32> to vector<1x16x128xf32>
    tpu.vector_store %arg5[%c0_8, %c0_9, %c0_10], %10 {strides = array<i32>} : memref<1x16x128xf32, #tpu.memory_space<vmem>>, vector<1x16x128xf32>,
    return
  }
  func.func @transform_0(%arg0: i32, %arg1: i32) -> (i32, i32) {
    %c0_i32 = arith.constant 0 : i32
    %c0_i32_0 = arith.constant 0 : i32
    return %arg1, %c0_i32 : i32, i32
  }
  func.func @transform_1(%arg0: i32, %arg1: i32) -> (i32, i32, i32) {
    %c0_i32 = arith.constant 0 : i32
    %c0_i32_0 = arith.constant 0 : i32
    %c0_i32_1 = arith.constant 0 : i32
    return %arg0, %c0_i32, %c0_i32_0 : i32, i32, i32
  }
  func.func @transform_2(%arg0: i32, %arg1: i32) -> (i32, i32) {
    %c0_i32 = arith.constant 0 : i32
    %c0_i32_0 = arith.constant 0 : i32
    %c0_i32_1 = arith.constant 0 : i32
    return %c0_i32, %c0_i32_0 : i32, i32
  }
  func.func @transform_3(%arg0: i32, %arg1: i32) -> (i32, i32, i32) {
    %c0_i32 = arith.constant 0 : i32
    %c0_i32_0 = arith.constant 0 : i32
    return %arg0, %arg1, %c0_i32 : i32, i32, i32
  }
}

</mosaic_0001>

<llo_original>
// kernel: tpu_custom_call.1
$region0: #{tpu_custom_call.1}
  #allocation0 [shape = 'u32[]', space=smem, size = 0x4, offset = 0x4, fixed_abs, tag = 'smem constant byte address 0x4 - core index']
  #allocation1 [shape = 'u32[144,128]{1,0:T(1,128)}', space=vmem, size = 0x12000, scoped, tag = 'internal scratch']
  %s0 = inlined_call_operand.vmem [shape: f32[16,16], index: 0, kind: input, shape index: {}]
  %s1 = inlined_call_operand.vmem [shape: f32[2,16,32], index: 1, kind: input, shape index: {}]
  %s2 = inlined_call_operand.vmem [shape: f32[128,32], index: 2, kind: input, shape index: {}]
  %s3 = inlined_call_operand.hbm [shape: f32[2,16,128], index: 3, kind: output, shape index: {}]
  %s4 = sld [smem:[#allocation0]]
  $region45: #{tpu_custom_call.1} parent=0
    _
  %s6 = ssub.s32 1, %s4
  %s7 = scalar_select 0, %s6, %s4
  $region1: #{tpu_custom_call.1} parent=0
    #allocation2 [shape = 'u8[16384]{0}', space=vmem, size = 0x4000, scoped, tag = 'output window, operand 0']
    #allocation3 [shape = 's32[2]{0}', space=sflag, size = 0x8, scoped, tag = 'scoped memory for tpu_custom_call.1']
    %8 = vsyncpa [#allocation3], 0
    %s9 = scalar_lea.sflag [#allocation3], 1
    %10 = vsyncpa %s9, 0
    loop: start=0, step=1, limit=4
    $region2: #{tpu_custom_call.1} parent=1 // loop_pre_header
      _
    $region3: #{tpu_custom_call.1} parent=1 // loop_header
      %s12 = sphi 0, %s16
      %p13 = scmp.ge.s32.totalorder %s12, 4
      %s19 = sphi 0, %s31
      %s20 = sphi 0, %s27
      %s21 = sphi 0, %s19
      %s22 = sphi 0, %s20
      %s23 = sphi 0, %s21
      %s24 = sphi 0, %s22
      %s34 = sphi 0, %s36
      %s37 = sphi 0, %s34
      %s38 = sphi 0, %s37
      %s54 = sphi 0, %s38
      %s60 = sphi 0, %s62
      %s63 = sphi 0, %s60
      %s64 = sphi 0, %s63
      %s80 = sphi 0, %s64
      %s84 = sphi 0, %s84
      %s86 = sphi 0, %s84
      %s87 = sphi 0, %s86
      %s101 = sphi 0, %s87
      %s109 = sphi 0, %s111
      %s112 = sphi 0, %s109
      %s113 = sphi 0, %s112
      %s129 = sphi 0, %s113
    $region4: #{tpu_custom_call.1} parent=1 // loop_header_branch
      %15 = sbr.rel (%p13) target = $region8
    $region5: #{tpu_custom_call.1} parent=1 // loop_body
      %s17 = ssub.s32 %s12, 1
      %s18 = ssub.s32 %s12, 2
      %s25 = sadd.s32 1, %s20
      %p26 = scmp.ge.s32.totalorder %s25, 1
      %s27 = scalar_select %p26, 0, %s25
      %s28 = sadd.s32 1, %s19
      %s29 = scalar_select %p26, %s28, %s19
      %p30 = scmp.ge.s32.totalorder %s29, 2
      %s31 = scalar_select %p30, 0, %s29
      %s32 = ssub.s32 %s20, %s27
      %p33 = scmp.eq.s32.totalorder %s32, 0
      %s35 = sadd.s32 %s34, 1
      %s36 = scalar_select %p33, %s34, %s35
      %p39 = pneg %p33
      %p40 = scmp.eq.s32.totalorder %s12, 1
      %p41 = por %p39, %p40
      %p42 = scmp.ne.s32.totalorder %s34, %s37
      %p43 = scmp.eq.s32.totalorder %s12, 0
      %p44 = por %p42, %p43
      %p45 = scmp.ne.s32.totalorder %s34, %s37
      %p46 = scmp.eq.s32.totalorder %s17, 1
      %p47 = por %p45, %p46
      %p48 = scmp.ne.s32.totalorder %s37, %s38
      %p49 = scmp.eq.s32.totalorder %s17, 0
      %p50 = por %p48, %p49
      %p51 = scmp.ne.s32.totalorder %s37, %s38
      %p52 = scmp.eq.s32.totalorder %s18, 1
      %p53 = por %p51, %p52
      %p55 = scmp.ne.s32.totalorder %s38, %s54
      %p56 = scmp.eq.s32.totalorder %s18, 0
      %p57 = por %p55, %p56
      %s58 = ssub.s32 %s19, %s31
      %p59 = scmp.eq.s32.totalorder %s58, 0
      %s61 = sadd.s32 %s60, 1
      %s62 = scalar_select %p59, %s60, %s61
      %p65 = pneg %p59
      %p66 = scmp.eq.s32.totalorder %s12, 1
      %p67 = por %p65, %p66
      %p68 = scmp.ne.s32.totalorder %s60, %s63
      %p69 = scmp.eq.s32.totalorder %s12, 0
      %p70 = por %p68, %p69
      %p71 = scmp.ne.s32.totalorder %s60, %s63
      %p72 = scmp.eq.s32.totalorder %s17, 1
      %p73 = por %p71, %p72
      %p74 = scmp.ne.s32.totalorder %s63, %s64
      %p75 = scmp.eq.s32.totalorder %s17, 0
      %p76 = por %p74, %p75
      %p77 = scmp.ne.s32.totalorder %s63, %s64
      %p78 = scmp.eq.s32.totalorder %s18, 1
      %p79 = por %p77, %p78
      %p81 = scmp.ne.s32.totalorder %s64, %s80
      %p82 = scmp.eq.s32.totalorder %s18, 0
      %p83 = por %p81, %p82
      %s85 = sadd.s32 %s84, 1
      %p88 = scmp.eq.s32.totalorder %s12, 1
      %p89 = scmp.ne.s32.totalorder %s84, %s86
      %p90 = scmp.eq.s32.totalorder %s12, 0
      %p91 = por %p89, %p90
      %p92 = scmp.ne.s32.totalorder %s84, %s86
      %p93 = scmp.eq.s32.totalorder %s17, 1
      %p94 = por %p92, %p93
      %p95 = scmp.ne.s32.totalorder %s86, %s87
      %p96 = scmp.eq.s32.totalorder %s17, 0
      %p97 = por %p95, %p96
      %p98 = scmp.ne.s32.totalorder %s86, %s87
      %p99 = scmp.eq.s32.totalorder %s18, 1
      %p100 = por %p98, %p99
      %p102 = scmp.ne.s32.totalorder %s87, %s101
      %p103 = scmp.eq.s32.totalorder %s18, 0
      %p104 = por %p102, %p103
      %s105 = ssub.s32 %s19, %s31
      %s106 = ssub.s32 %s20, %s27
      %s107 = sor.u32 %s105, %s106
      %p108 = scmp.eq.s32.totalorder %s107, 0
      %s110 = sadd.s32 %s109, 1
      %s111 = scalar_select %p108, %s109, %s110
      %p114 = pneg %p108
      %p115 = scmp.eq.s32.totalorder %s12, 1
      %p116 = por %p114, %p115
      %p117 = scmp.ne.s32.totalorder %s109, %s112
      %p118 = scmp.eq.s32.totalorder %s12, 0
      %p119 = por %p117, %p118
      %p120 = scmp.ne.s32.totalorder %s109, %s112
      %p121 = scmp.eq.s32.totalorder %s17, 1
      %p122 = por %p120, %p121
      %p123 = scmp.ne.s32.totalorder %s112, %s113
      %p124 = scmp.eq.s32.totalorder %s17, 0
      %p125 = por %p123, %p124
      %p126 = scmp.ne.s32.totalorder %s112, %s113
      %p127 = scmp.eq.s32.totalorder %s18, 1
      %p128 = por %p126, %p127
      %p130 = scmp.ne.s32.totalorder %s113, %s129
      %p131 = scmp.eq.s32.totalorder %s18, 0
      %p132 = por %p130, %p131
      %p133 = scmp.le.s32.totalorder 1, %s12
      %p134 = scmp.lt.s32.totalorder %s12, 3
      %p135 = pnand %p133, %p134
      %p136 = pneg %p135
      // Predicated region
      $region9: #{tpu_custom_call.1} parent=5 // pred_check
        _
      $region10: #{tpu_custom_call.1} parent=5 // pred_check_branch
        %138 = sbr.rel (%p135) target = $region12
      $region11: #{tpu_custom_call.1} parent=5 // pred_region
        %s139 = ssub.s32 %s12, 1
        // Predicated region
        $region13: #{tpu_custom_call.1} parent=11 // pred_check
          %p140 = pneg %p50
        $region14: #{tpu_custom_call.1} parent=11 // pred_check_branch
          %142 = sbr.rel (%p140) target = $region16
        $region15: #{tpu_custom_call.1} parent=11 // pred_region
          %s143 = smul.u32 2, %s22
          %p144 = scmp.lt.s32.totalorder %s143, 1
          %s145 = scalar_select %p144, %s143, 1
          %s146 = smul.addr %s145, 8
          %s147 = scalar_lea.vmem %s0, %s146
          %s148 = smul.u32 2, %s22
        $region16: #{tpu_custom_call.1} parent=11 // pred_fallthru
          _
        // Predicated region
        $region17: #{tpu_custom_call.1} parent=11 // pred_check
          %p149 = pneg %p97
        $region18: #{tpu_custom_call.1} parent=11 // pred_check_branch
          %151 = sbr.rel (%p149) target = $region20
        $region19: #{tpu_custom_call.1} parent=11 // pred_region
          _
        $region20: #{tpu_custom_call.1} parent=11 // pred_fallthru
          _
      $region12: #{tpu_custom_call.1} parent=5 // pred_fallthru
        _
      %p152 = scmp.lt.s32.totalorder %s12, 2
      // Predicated region
      $region21: #{tpu_custom_call.1} parent=5 // pred_check
        %p153 = pneg %p152
      $region22: #{tpu_custom_call.1} parent=5 // pred_check_branch
        %155 = sbr.rel (%p153) target = $region24
      $region23: #{tpu_custom_call.1} parent=5 // pred_region
        // Predicated region
        $region25: #{tpu_custom_call.1} parent=23 // pred_check
          %p156 = pneg %p70
        $region26: #{tpu_custom_call.1} parent=23 // pred_check_branch
          %158 = sbr.rel (%p156) target = $region28
        $region27: #{tpu_custom_call.1} parent=23 // pred_region
          %p159 = scmp.lt.s32.totalorder %s19, 1
          %s160 = scalar_select %p159, %s19, 1
          %s161 = smul.addr %s160, 2
          %s162 = smul.addr %s161, 8
          %s163 = scalar_lea.vmem %s1, %s162
        $region28: #{tpu_custom_call.1} parent=23 // pred_fallthru
          _
      $region24: #{tpu_custom_call.1} parent=5 // pred_fallthru
        _
      %p164 = scmp.le.s32.totalorder 1, %s12
      %p165 = scmp.lt.s32.totalorder %s12, 3
      %p166 = pnand %p164, %p165
      %p167 = pneg %p166
      // Predicated region
      $region29: #{tpu_custom_call.1} parent=5 // pred_check
        _
      $region30: #{tpu_custom_call.1} parent=5 // pred_check_branch
        %169 = sbr.rel (%p166) target = $region32
      $region31: #{tpu_custom_call.1} parent=5 // pred_region
        %s170 = ssub.s32 %s12, 1
        %s171 = smul.u32 2, %s22
        %p172 = scmp.lt.s32.totalorder %s171, 1
        %s173 = scalar_select %p172, %s171, 1
        %s174 = smul.addr %s173, 8
        %s175 = scalar_lea.vmem %s0, %s174
        %p176 = pneg %p50
        %p177 = pneg %p47
        %p178 = scmp.lt.s32.totalorder %s21, 1
        %s179 = scalar_select %p178, %s21, 1
        %s180 = smul.addr %s179, 2
        %s181 = smul.addr %s180, 8
        %s182 = scalar_lea.vmem %s1, %s181
        %p183 = pneg %p76
        %p184 = pneg %p73
        %p185 = pneg %p97
        %p186 = pneg %p94
        %p187 = pneg %p125
        %p188 = pneg %p122
        %s189 = sand.u32 %s112, 1
        %s190 = scalar_lea.sflag [#allocation3], %s189
        %s191 = sand.u32 %s112, 1
        %s192 = smul.addr %s191, 16
        %s193 = scalar_lea.vmem [#allocation2], %s192
        %s194 = smul.u32 2, %s22
        %p195 = scmp.lt.s32.totalorder %s194, 1
        %s196 = scalar_select %p195, %s194, 1
        %s197 = smul.addr %s196, 8
        %s198 = scalar_lea.vmem %s0, %s197
        %s199 = smul.u32 2, %s22
        %p200 = scmp.lt.s32.totalorder %s21, 1
        %s201 = scalar_select %p200, %s21, 1
        %s202 = smul.addr %s201, 2
        %s203 = smul.addr %s202, 8
        %s204 = scalar_lea.vmem %s1, %s203
        %s205 = smul.u32 2, %s22
        %v206 = vld [vmem:[%s198] sm:$0xff]
        %v207 = vld [vmem:[%s198 + $0x8] sm:$0xff]
        %v208 = vld [vmem:[%s204] sm:$0xff]
        %v209 = vld [vmem:[%s204 + $0x8] sm:$0xff]
        %vm210 = vcmask 130048
        %v212 = vsel %vm210, %v206, 0
        %v215 = vsel %vm210, %v207, 0
        %217 = vmatprep.subr.mxu0 0.0
        %218 = vmatpush1.msra.mxu0 0.0
        %219 = vmatprep.subr.mxu0 0.0
        %220 = vmatpush1.msra.mxu0 0.0
        %221 = vmatprep.subr.mxu0 0.0
        %222 = vmatpush1.msra.mxu0 0.0
        %223 = vmatprep.subr.mxu0 0.0
        %224 = vmatpush1.msra.mxu0 0.0
        %225 = vmatprep.subr.mxu0 0.0
        %226 = vmatpush1.msra.mxu0 0.0
        %227 = vmatprep.subr.mxu0 0.0
        %228 = vmatpush1.msra.mxu0 0.0
        %229 = vmatprep.subr.mxu0 0.0
        %230 = vmatpush1.msra.mxu0 0.0
        %231 = vmatprep.subr.mxu0 0.0
        %232 = vmatpush1.msra.mxu0 0.0
        %233 = vmatprep.subr.mxu0 0.0
        %234 = vmatpush1.msra.mxu0 0.0
        %235 = vmatprep.subr.mxu0 0.0
        %236 = vmatpush1.msra.mxu0 0.0
        %237 = vmatprep.subr.mxu0 0.0
        %238 = vmatpush1.msra.mxu0 0.0
        %239 = vmatprep.subr.mxu0 0.0
        %240 = vmatpush1.msra.mxu0 0.0
        %241 = vmatprep.subr.mxu0 0.0
        %242 = vmatpush1.msra.mxu0 0.0
        %243 = vmatprep.subr.mxu0 0.0
        %244 = vmatpush1.msra.mxu0 0.0
        %245 = vmatprep.subr.mxu0 0.0
        %246 = vmatpush1.msra.mxu0 %v209
        %247 = vmatprep.subr.mxu0 0.0
        %248 = vmatpush1.msra.mxu0 %v208
        %249 = vmatprep.subr.mxu0 0.0
        %250 = vmatpush2.msra.mxu0 0.0
        %251 = vmatprep.subr.mxu0 0.0
        %252 = vmatpush2.msra.mxu0 0.0
        %253 = vmatprep.subr.mxu0 0.0
        %254 = vmatpush2.msra.mxu0 0.0
        %255 = vmatprep.subr.mxu0 0.0
        %256 = vmatpush2.msra.mxu0 0.0
        %257 = vmatprep.subr.mxu0 0.0
        %258 = vmatpush2.msra.mxu0 0.0
        %259 = vmatprep.subr.mxu0 0.0
        %260 = vmatpush2.msra.mxu0 0.0
        %261 = vmatprep.subr.mxu0 0.0
        %262 = vmatpush2.msra.mxu0 0.0
        %263 = vmatprep.subr.mxu0 0.0
        %264 = vmatpush2.msra.mxu0 0.0
        %265 = vmatprep.subr.mxu0 0.0
        %266 = vmatpush2.msra.mxu0 0.0
        %267 = vmatprep.subr.mxu0 0.0
        %268 = vmatpush2.msra.mxu0 0.0
        %269 = vmatprep.subr.mxu0 0.0
        %270 = vmatpush2.msra.mxu0 0.0
        %271 = vmatprep.subr.mxu0 0.0
        %272 = vmatpush2.msra.mxu0 0.0
        %273 = vmatprep.subr.mxu0 0.0
        %274 = vmatpush2.msra.mxu0 0.0
        %275 = vmatprep.subr.mxu0 0.0
        %276 = vmatpush2.msra.mxu0 0.0
        %277 = vmatprep.subr.mxu0 0.0
        %278 = vmatpush2.msra.mxu0 0.0
        %279 = vmatprep.subr.mxu0 0.0
        %280 = vmatpush2.msra.mxu0 0.0
        %281 = vmatprep.mubr.f32.mxu0 0.0
        %282 = vmatmul.mubr.f32.gmra.mxu0 %v212
        %v283 = vpop.f32.mrf.mxu0
        %v284 = vadd.f32 0.0, %v283
        %v285 = vpop.f32.mrf.mxu0
        %286 = vmatprep.mubr.f32.mxu0 0.0
        %287 = vmatmul.mubr.f32.gmra.mxu0 %v215
        %v288 = vpop.f32.mrf.mxu0
        %v289 = vadd.f32 0.0, %v288
        %v290 = vpop.f32.mrf.mxu0
        %291 = vdwg.mxu0
        %v292 = vld [vmem:[%s2] sm:$0xff]
        %v293 = vld [vmem:[%s2 + $0x8] sm:$0xff]
        %v294 = vld [vmem:[%s2 + $0x10] sm:$0xff]
        %v295 = vld [vmem:[%s2 + $0x18] sm:$0xff]
        %v296 = vld [vmem:[%s2 + $0x20] sm:$0xff]
        %v297 = vld [vmem:[%s2 + $0x28] sm:$0xff]
        %v298 = vld [vmem:[%s2 + $0x30] sm:$0xff]
        %v299 = vld [vmem:[%s2 + $0x38] sm:$0xff]
        %v300 = vld [vmem:[%s2 + $0x40] sm:$0xff]
        %v301 = vld [vmem:[%s2 + $0x48] sm:$0xff]
        %v302 = vld [vmem:[%s2 + $0x50] sm:$0xff]
        %v303 = vld [vmem:[%s2 + $0x58] sm:$0xff]
        %v304 = vld [vmem:[%s2 + $0x60] sm:$0xff]
        %v305 = vld [vmem:[%s2 + $0x68] sm:$0xff]
        %v306 = vld [vmem:[%s2 + $0x70] sm:$0xff]
        %v307 = vld [vmem:[%s2 + $0x78] sm:$0xff]
        %vm308 = vcmask 261120
        %v310 = vsel %vm308, %v284, 0
        %v313 = vsel %vm308, %v289, 0
        %v316 = vsel %vm308, %v292, 0
        %v319 = vsel %vm308, %v293, 0
        %v322 = vsel %vm308, %v294, 0
        %v325 = vsel %vm308, %v295, 0
        %v328 = vsel %vm308, %v296, 0
        %v331 = vsel %vm308, %v297, 0
        %v334 = vsel %vm308, %v298, 0
        %v337 = vsel %vm308, %v299, 0
        %v340 = vsel %vm308, %v300, 0
        %v343 = vsel %vm308, %v301, 0
        %v346 = vsel %vm308, %v302, 0
        %v349 = vsel %vm308, %v303, 0
        %v352 = vsel %vm308, %v304, 0
        %v355 = vsel %vm308, %v305, 0
        %v358 = vsel %vm308, %v306, 0
        %v361 = vsel %vm308, %v307, 0
        %363 = vmatprep.subr.mxu0 0.0
        %364 = vmatpush1.xpose.msra.mxu0 %v361
        %365 = vmatprep.subr.mxu0 0.0
        %366 = vmatpush1.xpose.msra.mxu0 %v358
        %367 = vmatprep.subr.mxu0 0.0
        %368 = vmatpush1.xpose.msra.mxu0 %v355
        %369 = vmatprep.subr.mxu0 0.0
        %370 = vmatpush1.xpose.msra.mxu0 %v352
        %371 = vmatprep.subr.mxu0 0.0
        %372 = vmatpush1.xpose.msra.mxu0 %v349
        %373 = vmatprep.subr.mxu0 0.0
        %374 = vmatpush1.xpose.msra.mxu0 %v346
        %375 = vmatprep.subr.mxu0 0.0
        %376 = vmatpush1.xpose.msra.mxu0 %v343
        %377 = vmatprep.subr.mxu0 0.0
        %378 = vmatpush1.xpose.msra.mxu0 %v340
        %379 = vmatprep.subr.mxu0 0.0
        %380 = vmatpush1.xpose.msra.mxu0 %v337
        %381 = vmatprep.subr.mxu0 0.0
        %382 = vmatpush1.xpose.msra.mxu0 %v334
        %383 = vmatprep.subr.mxu0 0.0
        %384 = vmatpush1.xpose.msra.mxu0 %v331
        %385 = vmatprep.subr.mxu0 0.0
        %386 = vmatpush1.xpose.msra.mxu0 %v328
        %387 = vmatprep.subr.mxu0 0.0
        %388 = vmatpush1.xpose.msra.mxu0 %v325
        %389 = vmatprep.subr.mxu0 0.0
        %390 = vmatpush1.xpose.msra.mxu0 %v322
        %391 = vmatprep.subr.mxu0 0.0
        %392 = vmatpush1.xpose.msra.mxu0 %v319
        %393 = vmatprep.subr.mxu0 0.0
        %394 = vmatpush1.xpose.msra.mxu0 %v316
        %395 = vmatprep.subr.mxu0 0.0
        %396 = vmatpush2.xpose.msra.mxu0 0.0
        %397 = vmatprep.subr.mxu0 0.0
        %398 = vmatpush2.xpose.msra.mxu0 0.0
        %399 = vmatprep.subr.mxu0 0.0
        %400 = vmatpush2.xpose.msra.mxu0 0.0
        %401 = vmatprep.subr.mxu0 0.0
        %402 = vmatpush2.xpose.msra.mxu0 0.0
        %403 = vmatprep.subr.mxu0 0.0
        %404 = vmatpush2.xpose.msra.mxu0 0.0
        %405 = vmatprep.subr.mxu0 0.0
        %406 = vmatpush2.xpose.msra.mxu0 0.0
        %407 = vmatprep.subr.mxu0 0.0
        %408 = vmatpush2.xpose.msra.mxu0 0.0
        %409 = vmatprep.subr.mxu0 0.0
        %410 = vmatpush2.xpose.msra.mxu0 0.0
        %411 = vmatprep.subr.mxu0 0.0
        %412 = vmatpush2.xpose.msra.mxu0 0.0
        %413 = vmatprep.subr.mxu0 0.0
        %414 = vmatpush2.xpose.msra.mxu0 0.0
        %415 = vmatprep.subr.mxu0 0.0
        %416 = vmatpush2.xpose.msra.mxu0 0.0
        %417 = vmatprep.subr.mxu0 0.0
        %418 = vmatpush2.xpose.msra.mxu0 0.0
        %419 = vmatprep.subr.mxu0 0.0
        %420 = vmatpush2.xpose.msra.mxu0 0.0
        %421 = vmatprep.subr.mxu0 0.0
        %422 = vmatpush2.xpose.msra.mxu0 0.0
        %423 = vmatprep.subr.mxu0 0.0
        %424 = vmatpush2.xpose.msra.mxu0 0.0
        %425 = vmatprep.subr.mxu0 0.0
        %426 = vmatpush2.xpose.msra.mxu0 0.0
        %427 = vmatprep.mubr.f32.mxu0 0.0
        %428 = vmatmul.mubr.f32.gmra.mxu0 %v310
        %v429 = vpop.f32.mrf.mxu0
        %v430 = vadd.f32 0.0, %v429
        %v431 = vpop.f32.mrf.mxu0
        %432 = vmatprep.mubr.f32.mxu0 0.0
        %433 = vmatmul.mubr.f32.gmra.mxu0 %v313
        %v434 = vpop.f32.mrf.mxu0
        %v435 = vadd.f32 0.0, %v434
        %v436 = vpop.f32.mrf.mxu0
        %437 = vdwg.mxu0
        %v438 = vmax.f32 %v430, 0.0
        %v439 = vmax.f32 %v435, 0.0
        %440 = vst [vmem:[%s193] sm:$0xff] %v438
        %441 = vst [vmem:[%s193 + $0x8] sm:$0xff] %v439
        %s442 = sand.u32 %s112, 1
        %s443 = scalar_lea.sflag [#allocation3], %s442
        %s444 = sand.u32 %s112, 1
        %s445 = smul.addr %s444, 16
        %s446 = scalar_lea.vmem [#allocation2], %s445
        // Predicated region
        $region33: #{tpu_custom_call.1} parent=31 // pred_check
          %p447 = pneg %p122
        $region34: #{tpu_custom_call.1} parent=31 // pred_check_branch
          %449 = sbr.rel (%p447) target = $region36
        $region35: #{tpu_custom_call.1} parent=31 // pred_region
          %s450 = smul.u32 2, %s22
          %s452 = ssub.s32 256, 256
          %453 = vsyncadd %s443, %s452
          %s454 = smul.addr %s21, 2
          %s455 = sadd.s32 %s450, %s454
          %s456 = smul.addr %s455, 128
          %s457 = scalar_lea.hbm %s3, %s456
          %s458 = sshll.u32 %s446, 4
          %s459 = int_to_ptr.vmem [resolvable:$true] %s458
          %464 = dma.vmem_to_hbm [thread:$0]  %s459, 256, %s457, %s443, 128, 128, 8
        $region36: #{tpu_custom_call.1} parent=31 // pred_fallthru
          _
      $region32: #{tpu_custom_call.1} parent=5 // pred_fallthru
        _
      %p465 = scmp.le.s32.totalorder 2, %s12
      // Predicated region
      $region37: #{tpu_custom_call.1} parent=5 // pred_check
        %p466 = pneg %p465
      $region38: #{tpu_custom_call.1} parent=5 // pred_check_branch
        %468 = sbr.rel (%p466) target = $region40
      $region39: #{tpu_custom_call.1} parent=5 // pred_region
        %s469 = ssub.s32 %s12, 2
        // Predicated region
        $region41: #{tpu_custom_call.1} parent=39 // pred_check
          %p470 = pneg %p128
        $region42: #{tpu_custom_call.1} parent=39 // pred_check_branch
          %472 = sbr.rel (%p470) target = $region44
        $region43: #{tpu_custom_call.1} parent=39 // pred_region
          %s473 = sand.u32 %s113, 1
          %s474 = scalar_lea.sflag [#allocation3], %s473
          %s475 = sand.u32 %s113, 1
          %s476 = smul.addr %s475, 16
          %s477 = scalar_lea.vmem [#allocation2], %s476
          %478 = dma.done %s474, 256
        $region44: #{tpu_custom_call.1} parent=39 // pred_fallthru
          _
      $region40: #{tpu_custom_call.1} parent=5 // pred_fallthru
        _
    $region6: #{tpu_custom_call.1} parent=1 // loop_footer
      %s16 = sadd.s32 1, %s12
    $region7: #{tpu_custom_call.1} parent=1 // loop_footer_branch
      %11 = sbr.rel target = $region3
    $region8: #{tpu_custom_call.1} parent=1 // loop_exit
      _
    %479 = vsyncpa [#allocation3], 1
    %s480 = scalar_lea.sflag [#allocation3], 1
    %481 = vsyncpa %s480, 1

</llo_original>
